<compile_context>
chip_gen: v7x
topology: tpu7x:2x2x1
jax: 0.10.0
libtpu: 0.0.40
codegen_flags: <defaults>
</compile_context>

<pallas_src>
import jax
import jax.numpy as jnp
from jax import lax
from jax.experimental import pallas as pl
from jax.experimental.pallas import tpu as pltpu


def _make_l2_loss_kernel(C, HW, n_total, nb, row_chunk, need_tail_mask):
    """Build the kernel for one batch block of shape (nb, C, HW)."""
    # Static row-chunk schedule over the batch rows of the block: keeps the
    # per-op vector working set small (<= row_chunk*C*HW elements) while the
    # DMA'd block stays large.
    chunks = [(s, min(row_chunk, nb - s)) for s in range(0, nb, row_chunk)]

    def kernel(x_ref, t_ref, o_ref):
        # x_ref, t_ref: (nb, C, HW) blocks in VMEM (original input dtype).
        # o_ref: (1, 1) f32 partial-sum output block in SMEM (one per grid step).
        acc_ch = jnp.zeros((C, 1), jnp.float32)   # per-channel sums, positive cells
        acc_b = jnp.float32(0.0)                   # channel-0 sum, negative cells

        if need_tail_mask:
            n_base = pl.program_id(0) * nb

        for start, size in chunks:
            # Cast to f32 in-kernel (inputs may be bf16); accumulate in f32.
            x = x_ref[start:start + size].astype(jnp.float32)   # (size, C, HW)
            t = t_ref[start:start + size].astype(jnp.float32)
            d = x - t
            diff2 = d * d

            if need_tail_mask:
                # Ragged final block: rows past the true batch size hold
                # garbage.  Zeroing diff2 on those rows (via select, so NaN
                # garbage cannot propagate) kills both the a- and b-path
                # contributions, since both multiply diff2.
                row = lax.broadcasted_iota(jnp.int32, (size, C, HW), 0)
                valid = (n_base + start + row) < n_total
                diff2 = jnp.where(valid, diff2, 0.0)

            t0 = t[:, 0:1, :]                                    # objectness target
            a = (t0 == 1.0).astype(jnp.float32)                  # positive cells
            b = (t0 == 0.0).astype(jnp.float32)                  # negative cells

            # Per-channel masked partial sums (lane reduce, then fold batch rows).
            pa = jnp.sum(diff2 * a, axis=2, keepdims=True)       # (size, C, 1)
            acc_ch = acc_ch + jnp.sum(pa, axis=0)                # (C, 1)
            # Objectness channel on negative cells (weight 1.0).
            acc_b = acc_b + jnp.sum(diff2[:, 0:1, :] * b)

        # Tiny per-channel weight vector: 1.0 (obj), 0.2 (classes 1..20), 0.1 (rest).
        c_idx = lax.broadcasted_iota(jnp.int32, (C, 1), 0)
        w = jnp.where(c_idx == 0, 1.0,
                      jnp.where(c_idx < 21, 0.2, 0.1)).astype(jnp.float32)

        o_ref[0, 0] = jnp.sum(acc_ch * w) + acc_b

    return kernel


def l2_loss_func(x, target, *, batch_tile=None, row_chunk=8, debug=False):
    """Pallas implementation of L2_loss_func.forward. x, target: (N, C, H, W)."""
    if debug:
        # Mirror the torch module's host-side print side effect (off by default).
        print(target[0, 21:23, :, :])

    N, C, H, W = x.shape
    assert target.shape == x.shape
    HW = H * W

    # Native layout — free reshapes, no transpose/pad/astype passes over HBM.
    x3 = x.reshape(N, C, HW)
    t3 = target.reshape(N, C, HW)

    # Batch tile: up to 128 rows (~2.5 MiB of real data per input per step,
    # ~4 MiB padded per VMEM buffer -> ~16 MiB double-buffered, under the
    # 32 MiB limit set below; safe on v5e/v6e/v7x).
    if batch_tile is None:
        batch_tile = 128
    nb = min(batch_tile, N)
    grid_n = pl.cdiv(N, nb)
    need_tail_mask = (N % nb) != 0

    kernel = _make_l2_loss_kernel(C, HW, N, nb, min(row_chunk, nb), need_tail_mask)

    bytes_in = (x.dtype.itemsize + target.dtype.itemsize) * N * C * HW

    partials = pl.pallas_call(
        kernel,
        out_shape=jax.ShapeDtypeStruct((grid_n, 1), jnp.float32),
        grid_spec=pltpu.PrefetchScalarGridSpec(
            num_scalar_prefetch=0,
            grid=(grid_n,),
            in_specs=[
                # (C, HW) are full array dims -> exempt from the (8,128) rule.
                pl.BlockSpec((nb, C, HW), lambda i: (i, 0, 0)),
                pl.BlockSpec((nb, C, HW), lambda i: (i, 0, 0)),
            ],
            # One (1,1) partial per grid step -> no shared accumulator, so the
            # single grid axis can be "parallel" (uses both TCs on v7x).
            out_specs=pl.BlockSpec((1, 1), lambda i: (i, 0),
                                   memory_space=pltpu.MemorySpace.SMEM),
        ),
        compiler_params=pltpu.CompilerParams(
            dimension_semantics=("parallel",),
            vmem_limit_bytes=32 * 1024 * 1024),
        cost_estimate=pl.CostEstimate(
            flops=6 * N * C * HW,
            transcendentals=0,
            bytes_accessed=bytes_in + grid_n * 4),
    )(x3, t3)

    # TODO(synk): torch accumulates in float64; f32 partials summed in f32 here.
    return jnp.sum(partials)


def _l2_loss_ref(x, target):
    """Pure-JAX reference for validation."""
    x = x.astype(jnp.float32)
    t = target.astype(jnp.float32)
    t0 = t[:, 0:1, :, :]
    a = (t0 == 1.0).astype(jnp.float32)
    b = (t0 == 0.0).astype(jnp.float32)
    loss_p = ((x[:, 0:1] - t[:, 0:1]) ** 2) * a
    loss_cls = ((x[:, 1:21] - t[:, 1:21]) ** 2) * 0.2 * a
    loss_xy = ((x[:, 21:23] - t[:, 21:23]) ** 2) * 0.1 * a
    loss_lin = ((x[:, 23:] - t[:, 23:]) ** 2) * 0.1 * a
    loss_nopt = ((x[:, 0:1] - t[:, 0:1]) ** 2) * b
    return (loss_p.sum() + loss_xy.sum() + loss_lin.sum()
            + loss_cls.sum() + loss_nopt.sum())


if __name__ == "__main__":
    # Shapes consistent with the module: spatial forced to 14x14 by the
    # .view(N,1,14,14); C = 1 obj + 20 cls + 2 xy + 2 "L" channels = 25.
    key = jax.random.PRNGKey(0)
    k_case1, k_case2 = jax.random.split(key, 2)

    def make_inputs(k, N, C, H, W):
        kx, kt, km = jax.random.split(k, 3)
        x = jax.random.normal(kx, (N, C, H, W), dtype=jnp.float32)
        t = jax.random.normal(kt, (N, C, H, W), dtype=jnp.float32)
        # Channel 0 of target is a binary objectness map (exercises masks a/b).
        obj = jax.random.bernoulli(km, p=0.3, shape=(N, H, W)).astype(jnp.float32)
        t = t.at[:, 0, :, :].set(obj)
        return x, t

    # Case 1: the module's natural small shape — single block, single grid step.
    x1, t1 = make_inputs(k_case1, 2, 25, 14, 14)
    out1 = jax.block_until_ready(l2_loss_func(x1, t1))
    ref1 = _l2_loss_ref(x1, t1)
    assert jnp.allclose(out1, ref1, rtol=1e-5, atol=1e-5), (out1, ref1)

    # Case 2: multi-block grid (per-block partials over the "parallel" axis).
    x2, t2 = make_inputs(k_case2, 8, 25, 14, 14)
    out2 = jax.block_until_ready(l2_loss_func(x2, t2, batch_tile=4))
    ref2 = _l2_loss_ref(x2, t2)
    assert jnp.allclose(out2, ref2, rtol=1e-5, atol=1e-5), (out2, ref2)

    print("KERNEL_OK")
</pallas_src>

<mosaic_0001>
module attributes {stable_mosaic.version = 11 : i64} {
  func.func @kernel(%arg0: i32, %arg1: memref<2x25x196xf32, #tpu.memory_space<vmem>>, %arg2: memref<2x25x196xf32, #tpu.memory_space<vmem>>, %arg3: memref<1x1xf32, #tpu.memory_space<smem>>) attributes {dimension_semantics = [#tpu.dimension_semantics<parallel>], iteration_bounds = array<i64: 1>, scalar_prefetch = 0 : i64, scratch_operands = 0 : i64, tpu.core_type = #tpu.core_type<tc>, window_params = [{transform_indices = @transform_0, window_bounds = array<i64: 2, 25, 196>}, {transform_indices = @transform_1, window_bounds = array<i64: 2, 25, 196>}, {transform_indices = @transform_2, window_bounds = array<i64: 1, 1>}]} {
    %cst = arith.constant 0.000000e+00 : f32
    %0 = vector.broadcast %cst : f32 to vector<25x1xf32>
    %c0 = arith.constant 0 : index
    %c0_0 = arith.constant 0 : index
    %c0_1 = arith.constant 0 : index
    %1 = vector.load %arg1[%c0, %c0_0, %c0_1] : memref<2x25x196xf32, #tpu.memory_space<vmem>>, vector<2x25x196xf32>
    %c0_2 = arith.constant 0 : index
    %c0_3 = arith.constant 0 : index
    %c0_4 = arith.constant 0 : index
    %2 = vector.load %arg2[%c0_2, %c0_3, %c0_4] : memref<2x25x196xf32, #tpu.memory_space<vmem>>, vector<2x25x196xf32>
    %3 = arith.subf %1, %2 : vector<2x25x196xf32>
    %4 = arith.mulf %3, %3 : vector<2x25x196xf32>
    %5 = vector.extract_strided_slice %2 {offsets = [0, 0, 0], sizes = [2, 1, 196], strides = [1, 1, 1]} : vector<2x25x196xf32> to vector<2x1x196xf32>
    %cst_5 = arith.constant 1.000000e+00 : f32
    %6 = vector.broadcast %cst_5 : f32 to vector<2x1x196xf32>
    %7 = arith.cmpf oeq, %5, %6 : vector<2x1x196xf32>
    %8 = arith.extui %7 : vector<2x1x196xi1> to vector<2x1x196xi32>
    %9 = arith.sitofp %8 : vector<2x1x196xi32> to vector<2x1x196xf32>
    %cst_6 = arith.constant 0.000000e+00 : f32
    %10 = vector.broadcast %cst_6 : f32 to vector<2x1x196xf32>
    %11 = arith.cmpf oeq, %5, %10 : vector<2x1x196xf32>
    %12 = arith.extui %11 : vector<2x1x196xi1> to vector<2x1x196xi32>
    %13 = arith.sitofp %12 : vector<2x1x196xi32> to vector<2x1x196xf32>
    %14 = vector.broadcast %9 : vector<2x1x196xf32> to vector<2x25x196xf32>
    %15 = arith.mulf %4, %14 : vector<2x25x196xf32>
    %cst_7 = arith.constant dense<0.000000e+00> : vector<2x25xf32>
    %16 = vector.multi_reduction <add>, %15, %cst_7 [2] : vector<2x25x196xf32> to vector<2x25xf32>
    %17 = vector.shape_cast %16 : vector<2x25xf32> to vector<2x25x1xf32>
    %cst_8 = arith.constant dense<0.000000e+00> : vector<25x1xf32>
    %18 = vector.multi_reduction <add>, %17, %cst_8 [0] : vector<2x25x1xf32> to vector<25x1xf32>
    %19 = arith.addf %0, %18 : vector<25x1xf32>
    %20 = vector.extract_strided_slice %4 {offsets = [0, 0, 0], sizes = [2, 1, 196], strides = [1, 1, 1]} : vector<2x25x196xf32> to vector<2x1x196xf32>
    %21 = arith.mulf %20, %13 : vector<2x1x196xf32>
    %22 = vector.shape_cast %21 : vector<2x1x196xf32> to vector<1x2x1x196xf32>
    %cst_9 = arith.constant dense<0.000000e+00> : vector<1xf32>
    %23 = vector.multi_reduction <add>, %22, %cst_9 [1, 2, 3] : vector<1x2x1x196xf32> to vector<1xf32>
    %24 = vector.shape_cast %23 : vector<1xf32> to vector<1x1x1x1xf32>
    %25 = vector.extract %24[0, 0, 0, 0] : f32 from vector<1x1x1x1xf32>
    %cst_10 = arith.constant 0.000000e+00 : f32
    %26 = arith.addf %cst_10, %25 : f32
    %27 = tpu.iota {dimensions = array<i32: 0>} : vector<25x1xi32>
    %c0_i32 = arith.constant 0 : i32
    %28 = vector.broadcast %c0_i32 : i32 to vector<25x1xi32>
    %29 = arith.cmpi eq, %27, %28 : vector<25x1xi32>
    %c21_i32 = arith.constant 21 : i32
    %30 = vector.broadcast %c21_i32 : i32 to vector<25x1xi32>
    %31 = arith.cmpi slt, %27, %30 : vector<25x1xi32>
    %cst_11 = arith.constant 2.000000e-01 : f32
    %cst_12 = arith.constant 1.000000e-01 : f32
    %32 = vector.broadcast %cst_11 : f32 to vector<25x1xf32>
    %33 = vector.broadcast %cst_12 : f32 to vector<25x1xf32>
    %34 = arith.select %31, %32, %33 : vector<25x1xi1>, vector<25x1xf32>
    %cst_13 = arith.constant 1.000000e+00 : f32
    %35 = vector.broadcast %cst_13 : f32 to vector<25x1xf32>
    %36 = arith.select %29, %35, %34 : vector<25x1xi1>, vector<25x1xf32>
    %37 = arith.mulf %19, %36 : vector<25x1xf32>
    %38 = vector.shape_cast %37 : vector<25x1xf32> to vector<1x25x1xf32>
    %cst_14 = arith.constant dense<0.000000e+00> : vector<1xf32>
    %39 = vector.multi_reduction <add>, %38, %cst_14 [1, 2] : vector<1x25x1xf32> to vector<1xf32>
    %40 = vector.shape_cast %39 : vector<1xf32> to vector<1x1x1xf32>
    %41 = vector.extract %40[0, 0, 0] : f32 from vector<1x1x1xf32>
    %42 = arith.addf %41, %26 : f32
    %c0_15 = arith.constant 0 : index
    %c0_16 = arith.constant 0 : index
    %43 = memref.load %arg3[%c0_15, %c0_16] : memref<1x1xf32, #tpu.memory_space<smem>>
    memref.store %42, %arg3[%c0_15, %c0_16] : memref<1x1xf32, #tpu.memory_space<smem>>
    return
  }
  func.func @transform_0(%arg0: i32) -> (i32, i32, i32) {
    %c0_i32 = arith.constant 0 : i32
    %c0_i32_0 = arith.constant 0 : i32
    %c0_i32_1 = arith.constant 0 : i32
    return %arg0, %c0_i32, %c0_i32_0 : i32, i32, i32
  }
  func.func @transform_1(%arg0: i32) -> (i32, i32, i32) {
    %c0_i32 = arith.constant 0 : i32
    %c0_i32_0 = arith.constant 0 : i32
    %c0_i32_1 = arith.constant 0 : i32
    return %arg0, %c0_i32, %c0_i32_0 : i32, i32, i32
  }
  func.func @transform_2(%arg0: i32) -> (i32, i32) {
    %c0_i32 = arith.constant 0 : i32
    %c0_i32_0 = arith.constant 0 : i32
    return %arg0, %c0_i32 : i32, i32
  }
}

</mosaic_0001>

<llo_original>
// kernel: tpu_custom_call.1
$region0: #{tpu_custom_call.1}
  #allocation0 [shape = 'u32[]', space=smem, size = 0x4, offset = 0x4, fixed_abs, tag = 'smem constant byte address 0x4 - core index']
  #allocation1 [shape = 'u32[144,128]{1,0:T(1,128)}', space=vmem, size = 0x12000, scoped, tag = 'internal scratch']
  %s0 = inlined_call_operand.vmem [shape: f32[2,25,196], index: 0, kind: input, shape index: {}]
  %s1 = inlined_call_operand.vmem [shape: f32[2,25,196], index: 1, kind: input, shape index: {}]
  %s2 = inlined_call_operand.hbm [shape: f32[1,1], index: 2, kind: output, shape index: {}]
  %s3 = sld [smem:[#allocation0]]
  $region18: #{tpu_custom_call.1} parent=0
    _
  %s5 = ssub.s32 1, %s3
  %s6 = scalar_select 0, %s5, %s3
  $region1: #{tpu_custom_call.1} parent=0
    #allocation2 [shape = 'u8[512]{0}', space=smem, size = 0x200, scoped, tag = 'output window, operand 0, single buffered']
    #allocation3 [shape = 's32[1]{0}', space=sflag, size = 0x4, scoped, tag = 'scoped memory for tpu_custom_call.1']
    %7 = vsyncpa [#allocation3], 0
    // Predicated region
    $region2: #{tpu_custom_call.1} parent=1 // pred_check
      _
    $region3: #{tpu_custom_call.1} parent=1 // pred_check_branch
      %9 = sbr.rel (0) target = $region5
    $region4: #{tpu_custom_call.1} parent=1 // pred_region
      _
    $region5: #{tpu_custom_call.1} parent=1 // pred_fallthru
      _
    // Predicated region
    $region6: #{tpu_custom_call.1} parent=1 // pred_check
      _
    $region7: #{tpu_custom_call.1} parent=1 // pred_check_branch
      %11 = sbr.rel (0) target = $region9
    $region8: #{tpu_custom_call.1} parent=1 // pred_region
      _
    $region9: #{tpu_custom_call.1} parent=1 // pred_fallthru
      _
    %v12 = vld [vmem:[%s0] sm:$0xff]
    %v13 = vld [vmem:[%s0 + $0x8] sm:$0xff]
    %v14 = vld [vmem:[%s0 + $0x10] sm:$0xff]
    %v15 = vld [vmem:[%s0 + $0x18] sm:$0xff]
    %v16 = vld [vmem:[%s0 + $0x20] sm:$0xff]
    %v17 = vld [vmem:[%s0 + $0x28] sm:$0xff]
    %v18 = vld [vmem:[%s0 + $0x30] sm:$0x1]
    %v19 = vld [vmem:[%s0 + $0x38] sm:$0x1]
    %v20 = vld [vmem:[%s0 + $0x40] sm:$0xff]
    %v21 = vld [vmem:[%s0 + $0x48] sm:$0xff]
    %v22 = vld [vmem:[%s0 + $0x50] sm:$0xff]
    %v23 = vld [vmem:[%s0 + $0x58] sm:$0xff]
    %v24 = vld [vmem:[%s0 + $0x60] sm:$0xff]
    %v25 = vld [vmem:[%s0 + $0x68] sm:$0xff]
    %v26 = vld [vmem:[%s0 + $0x70] sm:$0x1]
    %v27 = vld [vmem:[%s0 + $0x78] sm:$0x1]
    %v28 = vld [vmem:[%s1] sm:$0xff]
    %v29 = vld [vmem:[%s1 + $0x8] sm:$0xff]
    %v30 = vld [vmem:[%s1 + $0x10] sm:$0xff]
    %v31 = vld [vmem:[%s1 + $0x18] sm:$0xff]
    %v32 = vld [vmem:[%s1 + $0x20] sm:$0xff]
    %v33 = vld [vmem:[%s1 + $0x28] sm:$0xff]
    %v34 = vld [vmem:[%s1 + $0x30] sm:$0x1]
    %v35 = vld [vmem:[%s1 + $0x38] sm:$0x1]
    %v36 = vld [vmem:[%s1 + $0x40] sm:$0xff]
    %v37 = vld [vmem:[%s1 + $0x48] sm:$0xff]
    %v38 = vld [vmem:[%s1 + $0x50] sm:$0xff]
    %v39 = vld [vmem:[%s1 + $0x58] sm:$0xff]
    %v40 = vld [vmem:[%s1 + $0x60] sm:$0xff]
    %v41 = vld [vmem:[%s1 + $0x68] sm:$0xff]
    %v42 = vld [vmem:[%s1 + $0x70] sm:$0x1]
    %v43 = vld [vmem:[%s1 + $0x78] sm:$0x1]
    %v44 = vsub.f32 %v12, %v28
    %v45 = vsub.f32 %v13, %v29
    %v46 = vsub.f32 %v14, %v30
    %v47 = vsub.f32 %v15, %v31
    %v48 = vsub.f32 %v16, %v32
    %v49 = vsub.f32 %v17, %v33
    %v50 = vsub.f32 %v18, %v34
    %v51 = vsub.f32 %v19, %v35
    %v52 = vsub.f32 %v20, %v36
    %v53 = vsub.f32 %v21, %v37
    %v54 = vsub.f32 %v22, %v38
    %v55 = vsub.f32 %v23, %v39
    %v56 = vsub.f32 %v24, %v40
    %v57 = vsub.f32 %v25, %v41
    %v58 = vsub.f32 %v26, %v42
    %v59 = vsub.f32 %v27, %v43
    %v60 = vmul.f32 %v44, %v44
    %v61 = vmul.f32 %v45, %v45
    %v62 = vmul.f32 %v46, %v46
    %v63 = vmul.f32 %v47, %v47
    %v64 = vmul.f32 %v48, %v48
    %v65 = vmul.f32 %v49, %v49
    %v66 = vmul.f32 %v50, %v50
    %v67 = vmul.f32 %v51, %v51
    %v68 = vmul.f32 %v52, %v52
    %v69 = vmul.f32 %v53, %v53
    %v70 = vmul.f32 %v54, %v54
    %v71 = vmul.f32 %v55, %v55
    %v72 = vmul.f32 %v56, %v56
    %v73 = vmul.f32 %v57, %v57
    %v74 = vmul.f32 %v58, %v58
    %v75 = vmul.f32 %v59, %v59
    %vm76 = vcmp.eq.f32.partialorder %v28, 1.0
    %vm77 = vcmp.eq.f32.partialorder %v29, 1.0
    %vm78 = vcmp.eq.f32.partialorder %v36, 1.0
    %vm79 = vcmp.eq.f32.partialorder %v37, 1.0
    %v80 = vsel %vm76, 1, 0
    %v81 = vsel %vm77, 1, 0
    %v82 = vsel %vm78, 1, 0
    %v83 = vsel %vm79, 1, 0
    %v84 = vcvt.s32.f32 %v80
    %v85 = vcvt.s32.f32 %v81
    %v86 = vcvt.s32.f32 %v82
    %v87 = vcvt.s32.f32 %v83
    %vm88 = vcmp.eq.f32.partialorder %v28, 0.0
    %vm89 = vcmp.eq.f32.partialorder %v29, 0.0
    %vm90 = vcmp.eq.f32.partialorder %v36, 0.0
    %vm91 = vcmp.eq.f32.partialorder %v37, 0.0
    %v92 = vsel %vm88, 1, 0
    %v93 = vsel %vm89, 1, 0
    %v94 = vsel %vm90, 1, 0
    %v95 = vsel %vm91, 1, 0
    %v96 = vcvt.s32.f32 %v92
    %v97 = vcvt.s32.f32 %v93
    %v98 = vcvt.s32.f32 %v94
    %v99 = vcvt.s32.f32 %v95
    %v100 = vlaneseq
    %v101 = vshrl.u32 %v100, 7
    %v102 = vsub.s32 0, %v101
    %v103 = vrot.slane %v84, %v102
    %v104 = vlaneseq
    %v105 = vshrl.u32 %v104, 7
    %v106 = vsub.s32 0, %v105
    %v107 = vrot.slane %v85, %v106
    %v108 = vlaneseq
    %v109 = vshrl.u32 %v108, 7
    %v110 = vsub.s32 0, %v109
    %v111 = vrot.slane %v86, %v110
    %v112 = vlaneseq
    %v113 = vshrl.u32 %v112, 7
    %v114 = vsub.s32 0, %v113
    %v115 = vrot.slane %v87, %v114
    %v116 = vmul.f32 %v60, %v103
    %v117 = vmul.f32 %v61, %v107
    %v118 = vmul.f32 %v62, %v103
    %v119 = vmul.f32 %v63, %v107
    %v120 = vmul.f32 %v64, %v103
    %v121 = vmul.f32 %v65, %v107
    %v122 = vmul.f32 %v66, %v103
    %v123 = vmul.f32 %v67, %v107
    %v124 = vmul.f32 %v68, %v111
    %v125 = vmul.f32 %v69, %v115
    %v126 = vmul.f32 %v70, %v111
    %v127 = vmul.f32 %v71, %v115
    %v128 = vmul.f32 %v72, %v111
    %v129 = vmul.f32 %v73, %v115
    %v130 = vmul.f32 %v74, %v111
    %v131 = vmul.f32 %v75, %v115
    %vm132 = vcmask 556032
    %v133 = vsel %vm132, %v117, 0.0
    %v134 = vadd.f32 %v116, %v133
    %135 = vadd.xlane.f32.xlu0 %v134
    %v136 = vpop.xlane.xlu0 %135
    %v137 = vsel %vm132, %v119, 0.0
    %v138 = vadd.f32 %v118, %v137
    %139 = vadd.xlane.f32.xlu0 %v138
    %v140 = vpop.xlane.xlu0 %139
    %v141 = vsel %vm132, %v121, 0.0
    %v142 = vadd.f32 %v120, %v141
    %143 = vadd.xlane.f32.xlu0 %v142
    %v144 = vpop.xlane.xlu0 %143
    %vm145 = vcmask 1040384
    %v146 = vsel %vm145, %v122, 0.0
    %vm147 = vcmask 548864
    %v148 = vsel %vm147, %v123, 0.0
    %v149 = vadd.f32 %v146, %v148
    %150 = vadd.xlane.f32.xlu0 %v149
    %v151 = vpop.xlane.xlu0 %150
    %v152 = vsel %vm132, %v125, 0.0
    %v153 = vadd.f32 %v124, %v152
    %154 = vadd.xlane.f32.xlu0 %v153
    %v155 = vpop.xlane.xlu0 %154
    %v156 = vsel %vm132, %v127, 0.0
    %v157 = vadd.f32 %v126, %v156
    %158 = vadd.xlane.f32.xlu0 %v157
    %v159 = vpop.xlane.xlu0 %158
    %v160 = vsel %vm132, %v129, 0.0
    %v161 = vadd.f32 %v128, %v160
    %162 = vadd.xlane.f32.xlu0 %v161
    %v163 = vpop.xlane.xlu0 %162
    %v164 = vsel %vm145, %v130, 0.0
    %v165 = vsel %vm147, %v131, 0.0
    %v166 = vadd.f32 %v164, %v165
    %167 = vadd.xlane.f32.xlu0 %v166
    %v168 = vpop.xlane.xlu0 %167
    %v169 = vadd.f32 %v136, %v155
    %v170 = vadd.f32 %v140, %v159
    %v171 = vadd.f32 %v144, %v163
    %v172 = vsel %vm145, %v151, 0.0
    %v173 = vsel %vm145, %v168, 0.0
    %v174 = vadd.f32 %v172, %v173
    %v175 = vadd.f32 %v169, 0.0
    %v176 = vadd.f32 %v170, 0.0
    %v177 = vadd.f32 %v171, 0.0
    %v178 = vadd.f32 %v174, 0.0
    %v179 = vmul.f32 %v60, %v96
    %v180 = vmul.f32 %v61, %v97
    %v181 = vmul.f32 %v68, %v98
    %v182 = vmul.f32 %v69, %v99
    %v183 = vsel %vm145, %v179, 0.0
    %v184 = vsel %vm147, %v180, 0.0
    %v185 = vadd.f32 %v183, %v184
    %v186 = vsel %vm145, %v181, 0.0
    %v187 = vadd.f32 %v185, %v186
    %v188 = vsel %vm147, %v182, 0.0
    %v189 = vadd.f32 %v187, %v188
    %190 = vadd.xlane.f32.xlu0 %v189
    %v191 = vpop.xlane.xlu0 %190
    %v192 = vrot.slane %v191, 4
    %v193 = vadd.f32 %v191, %v192
    %v194 = vrot.slane %v193, 2
    %v195 = vadd.f32 %v193, %v194
    %v196 = vrot.slane %v195, 1
    %v197 = vadd.f32 %v195, %v196
    %s198 = vtos %v197
    %s199 = sadd.f32 %s198, 0.0
    %v200 = vlaneseq
    %v201 = vshrl.u32 %v200, 7
    %v202 = vadd.s32 %v201, 8
    %v203 = vadd.s32 %v201, 16
    %v204 = vadd.s32 %v201, 24
    %vm205 = vcmp.eq.s32.totalorder %v201, 0
    %vm206 = vcmp.eq.s32.totalorder %v202, 0
    %vm207 = vcmp.eq.s32.totalorder %v203, 0
    %vm208 = vcmp.eq.s32.totalorder %v204, 0
    %vm209 = vcmp.lt.s32.totalorder %v201, 21
    %vm210 = vcmp.lt.s32.totalorder %v202, 21
    %vm211 = vcmp.lt.s32.totalorder %v203, 21
    %vm212 = vcmp.lt.s32.totalorder %v204, 21
    %v213 = vsel %vm209, 0.2, 0.1
    %v214 = vsel %vm210, 0.2, 0.1
    %v215 = vsel %vm211, 0.2, 0.1
    %v216 = vsel %vm212, 0.2, 0.1
    %v217 = vsel %vm205, 1.0, %v213
    %v218 = vsel %vm206, 1.0, %v214
    %v219 = vsel %vm207, 1.0, %v215
    %v220 = vsel %vm208, 1.0, %v216
    %v221 = vmul.f32 %v175, %v217
    %v222 = vmul.f32 %v176, %v218
    %v223 = vmul.f32 %v177, %v219
    %v224 = vmul.f32 %v178, %v220
    %vm225 = vcmask 7168
    %v226 = vsel %vm225, %v221, 0.0
    %v227 = vsel %vm225, %v222, 0.0
    %v228 = vadd.f32 %v226, %v227
    %v229 = vsel %vm225, %v223, 0.0
    %v230 = vadd.f32 %v228, %v229
    %vm231 = vcmask 0
    %v232 = vsel %vm231, %v224, 0.0
    %v233 = vadd.f32 %v230, %v232
    %234 = vadd.xlane.f32.xlu0 %v233
    %v235 = vpop.xlane.xlu0 %234
    %v236 = vrot.slane %v235, 4
    %v237 = vadd.f32 %v235, %v236
    %v238 = vrot.slane %v237, 2
    %v239 = vadd.f32 %v237, %v238
    %v240 = vrot.slane %v239, 1
    %v241 = vadd.f32 %v239, %v240
    %s242 = vtos %v241
    %s243 = sadd.f32 %s242, %s199
    %s244 = scalar_lea.smem [#allocation2], 0
    %245 = sst [smem:[%s244]] %s243
    // Predicated region
    $region10: #{tpu_custom_call.1} parent=1 // pred_check
      _
    $region11: #{tpu_custom_call.1} parent=1 // pred_check_branch
      %247 = sbr.rel (0) target = $region13
    $region12: #{tpu_custom_call.1} parent=1 // pred_region
      %s249 = ssub.s32 16, 16
      %250 = vsyncadd [#allocation3], %s249
      %253 = dma.smem_to_hbm [#allocation2], 16, %s2, [#allocation3]
    $region13: #{tpu_custom_call.1} parent=1 // pred_fallthru
      _
    // Predicated region
    $region14: #{tpu_custom_call.1} parent=1 // pred_check
      _
    $region15: #{tpu_custom_call.1} parent=1 // pred_check_branch
      %255 = sbr.rel (0) target = $region17
    $region16: #{tpu_custom_call.1} parent=1 // pred_region
      %256 = dma.done [#allocation3], 16
    $region17: #{tpu_custom_call.1} parent=1 // pred_fallthru
      _
    %257 = sfence
    %258 = vsyncpa [#allocation3], 1

</llo_original>
